<compile_context>
chip_gen: v5e
topology: v5e:2x2
jax: 0.10.0
libtpu: 0.0.40
codegen_flags: <defaults>
</compile_context>

<pallas_src>
import functools

import jax
import jax.numpy as jnp
from jax.experimental import pallas as pl
from jax.experimental.pallas import tpu as pltpu


def counter_actor_kernel(x_ref, w1_ref, b1_ref, wh_ref, bh_ref, w2_ref, b2_ref,
                         out_ref, *, eps, inv_u_n):
    # fc1 (normalization already folded into w1/b1) + leaky_relu
    t = jnp.dot(x_ref[...], w1_ref[...],
                preferred_element_type=jnp.float32) + b1_ref[...]
    h = jnp.maximum(t, 0.01 * t)

    # hidden + leaky_relu
    t = jnp.dot(h, wh_ref[...],
                preferred_element_type=jnp.float32) + bh_ref[...]
    h = jnp.maximum(t, 0.01 * t)

    # fc2 (output lanes padded to 128; padded columns carry a -1e30 bias)
    logits = jnp.dot(h, w2_ref[...],
                     preferred_element_type=jnp.float32) + b2_ref[...]

    # softmax over the padded lane axis (padded cols -> exp(~-1e30) == 0)
    m = jnp.max(logits, axis=1, keepdims=True)
    e = jnp.exp(logits - m)
    p = e * pl.reciprocal(jnp.sum(e, axis=1, keepdims=True), approx=True)

    # epsilon mixing (padded columns are sliced away by the wrapper)
    out_ref[...] = (1.0 - eps) * p + eps * inv_u_n


def _round_up(n, m):
    return ((n + m - 1) // m) * m


def counter_actor_forward(x, w1, b1, wh, bh, w2, b2, *, mu, std, eps, u_n,
                          tile_b=256):
    """x: (B, x_state_n) f32.  w*: (in, out), b*: (1, out)."""
    B, x_state_n = x.shape
    h_state_n = w1.shape[1]
    assert w1.shape == (x_state_n, h_state_n)
    assert wh.shape == (h_state_n, h_state_n)
    assert w2.shape == (h_state_n, u_n)

    # ---- host-side parameter folding / padding -----------------------------
    # Fold (x - mu)/std into fc1:  (x-mu)/std @ W + b == x @ (W/std) + (b - mu/std * sum_in(W))
    inv_std = 1.0 / float(std)
    w1f = (w1 * inv_std).astype(jnp.float32)
    b1f = (b1 - (float(mu) * inv_std) *
           jnp.sum(w1, axis=0, keepdims=True)).astype(jnp.float32)

    # Pad fc2 output dimension to a lane-dense multiple of 128.
    n_pad = _round_up(u_n, 128)
    w2p = jnp.zeros((h_state_n, n_pad), jnp.float32).at[:, :u_n].set(w2)
    b2p = jnp.full((1, n_pad), -1e30, jnp.float32).at[:, :u_n].set(b2)

    # Pad batch to a multiple of the batch tile (padded rows are discarded).
    tile_b = min(tile_b, _round_up(B, 8))
    b_pad = _round_up(B, tile_b)
    if b_pad != B:
        x = jnp.pad(x, ((0, b_pad - B), (0, 0)))
    grid = (b_pad // tile_b,)

    kernel = functools.partial(counter_actor_kernel,
                               eps=float(eps), inv_u_n=1.0 / float(u_n))

    # Weights/biases: full-extent blocks with a constant index_map so they are
    # fetched once and stay VMEM-resident across batch tiles.
    const = lambda shape: pl.BlockSpec(shape, lambda i: (0, 0))

    out = pl.pallas_call(
        kernel,
        out_shape=jax.ShapeDtypeStruct((b_pad, n_pad), jnp.float32),
        grid=grid,
        in_specs=[
            pl.BlockSpec((tile_b, x_state_n), lambda i: (i, 0)),
            const(w1f.shape), const(b1f.shape),
            const(wh.shape), const(bh.shape),
            const(w2p.shape), const(b2p.shape),
        ],
        out_specs=pl.BlockSpec((tile_b, n_pad), lambda i: (i, 0)),
        compiler_params=pltpu.CompilerParams(
            dimension_semantics=("parallel",)),
    )(x, w1f, b1f, wh, bh, w2p, b2p)

    return out[:B, :u_n]


def _reference_forward(x, w1, b1, wh, bh, w2, b2, *, mu, std, eps, u_n):
    x = (x - mu) / std
    h = jnp.dot(x, w1) + b1
    h = jnp.where(h > 0, h, 0.01 * h)
    h = jnp.dot(h, wh) + bh
    h = jnp.where(h > 0, h, 0.01 * h)
    logits = jnp.dot(h, w2) + b2
    p = jax.nn.softmax(logits, axis=1)
    return (1.0 - eps) * p + eps / u_n


if __name__ == "__main__":
    # Module hyper-parameters (small, consistent with the forward pass).
    x_state_n = 16   # params['x_state_n']
    h_state_n = 32   # params['h_state_n']
    u_n = 8          # params['u_n']
    mu = 0.5         # params['mu']
    std = 2.0        # params['std']
    eps = 0.5
    B = 512          # batched evaluations (2 grid steps at tile_b=256)

    key = jax.random.PRNGKey(0)
    kx, k1, kb1, kh, kbh, k2, kb2 = jax.random.split(key, 7)

    x = jax.random.normal(kx, (B, x_state_n), dtype=jnp.float32)

    # Deterministic synthetic parameters (Linear weights stored as (in, out)).
    w1 = 0.1 * jax.random.normal(k1, (x_state_n, h_state_n), dtype=jnp.float32)
    b1 = 0.1 * jax.random.normal(kb1, (1, h_state_n), dtype=jnp.float32)
    wh = 0.1 * jax.random.normal(kh, (h_state_n, h_state_n), dtype=jnp.float32)
    bh = 0.1 * jax.random.normal(kbh, (1, h_state_n), dtype=jnp.float32)
    w2 = 0.1 * jax.random.normal(k2, (h_state_n, u_n), dtype=jnp.float32)
    b2 = 0.1 * jax.random.normal(kb2, (1, u_n), dtype=jnp.float32)

    # TODO(synk): self.gru (nn.GRU) is constructed in __init__ but never used
    # in forward(), so it is intentionally not implemented here.

    policy = counter_actor_forward(
        x, w1, b1, wh, bh, w2, b2, mu=mu, std=std, eps=eps, u_n=u_n)
    policy = jax.block_until_ready(policy)

    ref = _reference_forward(
        x, w1, b1, wh, bh, w2, b2, mu=mu, std=std, eps=eps, u_n=u_n)
    assert policy.shape == (B, u_n)
    # Tolerance loosened slightly vs 1e-5 because the softmax denominator uses
    # the EUP approximate reciprocal (~2^-12 relative error).
    assert jnp.allclose(policy, ref, atol=1e-4, rtol=1e-3), (
        float(jnp.max(jnp.abs(policy - ref))))
    # rows of the mixed policy still sum to ~1
    assert jnp.allclose(jnp.sum(policy, axis=1), 1.0, atol=1e-3)

    print("KERNEL_OK")
</pallas_src>

<mosaic_0001>
module attributes {stable_mosaic.version = 11 : i64} {
  func.func @counter_actor_kernel(%arg0: i32, %arg1: memref<256x16xf32, #tpu.memory_space<vmem>>, %arg2: memref<16x32xf32, #tpu.memory_space<vmem>>, %arg3: memref<1x32xf32, #tpu.memory_space<vmem>>, %arg4: memref<32x32xf32, #tpu.memory_space<vmem>>, %arg5: memref<1x32xf32, #tpu.memory_space<vmem>>, %arg6: memref<32x128xf32, #tpu.memory_space<vmem>>, %arg7: memref<1x128xf32, #tpu.memory_space<vmem>>, %arg8: memref<256x128xf32, #tpu.memory_space<vmem>>) attributes {dimension_semantics = [#tpu.dimension_semantics<parallel>], iteration_bounds = array<i64: 2>, scalar_prefetch = 0 : i64, scratch_operands = 0 : i64, tpu.core_type = #tpu.core_type<tc>, window_params = [{transform_indices = @transform_0, window_bounds = array<i64: 256, 16>}, {pipeline_mode = #tpu.pipeline_mode<synchronous>, transform_indices = @transform_1, window_bounds = array<i64: 16, 32>}, {pipeline_mode = #tpu.pipeline_mode<synchronous>, transform_indices = @transform_2, window_bounds = array<i64: 1, 32>}, {pipeline_mode = #tpu.pipeline_mode<synchronous>, transform_indices = @transform_3, window_bounds = array<i64: 32, 32>}, {pipeline_mode = #tpu.pipeline_mode<synchronous>, transform_indices = @transform_4, window_bounds = array<i64: 1, 32>}, {pipeline_mode = #tpu.pipeline_mode<synchronous>, transform_indices = @transform_5, window_bounds = array<i64: 32, 128>}, {pipeline_mode = #tpu.pipeline_mode<synchronous>, transform_indices = @transform_6, window_bounds = array<i64: 1, 128>}, {transform_indices = @transform_7, window_bounds = array<i64: 256, 128>}]} {
    %c0 = arith.constant 0 : index
    %c0_0 = arith.constant 0 : index
    %0 = vector.load %arg1[%c0, %c0_0] : memref<256x16xf32, #tpu.memory_space<vmem>>, vector<256x16xf32>
    %c0_1 = arith.constant 0 : index
    %c0_2 = arith.constant 0 : index
    %1 = vector.load %arg2[%c0_1, %c0_2] : memref<16x32xf32, #tpu.memory_space<vmem>>, vector<16x32xf32>
    %cst = arith.constant dense<0.000000e+00> : vector<256x32xf32>
    %2 = tpu.matmul %0, %1, %cst {dimension_numbers = #tpu.dot_dimension_numbers<[1], [0], [0], [1], [0, 0, 1, 1], [], []>} : vector<256x16xf32>, vector<16x32xf32>, vector<256x32xf32> -> vector<256x32xf32>
    %c0_3 = arith.constant 0 : index
    %c0_4 = arith.constant 0 : index
    %3 = vector.load %arg3[%c0_3, %c0_4] : memref<1x32xf32, #tpu.memory_space<vmem>>, vector<1x32xf32>
    %4 = vector.broadcast %3 : vector<1x32xf32> to vector<256x32xf32>
    %5 = arith.addf %2, %4 : vector<256x32xf32>
    %cst_5 = arith.constant 0.00999999977 : f32
    %6 = vector.broadcast %cst_5 : f32 to vector<256x32xf32>
    %7 = arith.mulf %6, %5 : vector<256x32xf32>
    %8 = arith.maximumf %5, %7 : vector<256x32xf32>
    %c0_6 = arith.constant 0 : index
    %c0_7 = arith.constant 0 : index
    %9 = vector.load %arg4[%c0_6, %c0_7] : memref<32x32xf32, #tpu.memory_space<vmem>>, vector<32x32xf32>
    %cst_8 = arith.constant dense<0.000000e+00> : vector<256x32xf32>
    %10 = tpu.matmul %8, %9, %cst_8 {dimension_numbers = #tpu.dot_dimension_numbers<[1], [0], [0], [1], [0, 0, 1, 1], [], []>} : vector<256x32xf32>, vector<32x32xf32>, vector<256x32xf32> -> vector<256x32xf32>
    %c0_9 = arith.constant 0 : index
    %c0_10 = arith.constant 0 : index
    %11 = vector.load %arg5[%c0_9, %c0_10] : memref<1x32xf32, #tpu.memory_space<vmem>>, vector<1x32xf32>
    %12 = vector.broadcast %11 : vector<1x32xf32> to vector<256x32xf32>
    %13 = arith.addf %10, %12 : vector<256x32xf32>
    %cst_11 = arith.constant 0.00999999977 : f32
    %14 = vector.broadcast %cst_11 : f32 to vector<256x32xf32>
    %15 = arith.mulf %14, %13 : vector<256x32xf32>
    %16 = arith.maximumf %13, %15 : vector<256x32xf32>
    %c0_12 = arith.constant 0 : index
    %c0_13 = arith.constant 0 : index
    %17 = vector.load %arg6[%c0_12, %c0_13] : memref<32x128xf32, #tpu.memory_space<vmem>>, vector<32x128xf32>
    %cst_14 = arith.constant dense<0.000000e+00> : vector<256x128xf32>
    %18 = tpu.matmul %16, %17, %cst_14 {dimension_numbers = #tpu.dot_dimension_numbers<[1], [0], [0], [1], [0, 0, 1, 1], [], []>} : vector<256x32xf32>, vector<32x128xf32>, vector<256x128xf32> -> vector<256x128xf32>
    %c0_15 = arith.constant 0 : index
    %c0_16 = arith.constant 0 : index
    %19 = vector.load %arg7[%c0_15, %c0_16] : memref<1x128xf32, #tpu.memory_space<vmem>>, vector<1x128xf32>
    %20 = vector.broadcast %19 : vector<1x128xf32> to vector<256x128xf32>
    %21 = arith.addf %18, %20 : vector<256x128xf32>
    %cst_17 = arith.constant dense<0xFF800000> : vector<256xf32>
    %22 = vector.multi_reduction <maximumf>, %21, %cst_17 [1] : vector<256x128xf32> to vector<256xf32>
    %23 = vector.shape_cast %22 : vector<256xf32> to vector<256x1xf32>
    %24 = vector.broadcast %23 : vector<256x1xf32> to vector<256x128xf32>
    %25 = arith.subf %21, %24 : vector<256x128xf32>
    %26 = math.exp %25 : vector<256x128xf32>
    %cst_18 = arith.constant dense<0.000000e+00> : vector<256xf32>
    %27 = vector.multi_reduction <add>, %26, %cst_18 [1] : vector<256x128xf32> to vector<256xf32>
    %28 = vector.shape_cast %27 : vector<256xf32> to vector<256x1xf32>
    %29 = tpu.reciprocal %28 {approx = true} : vector<256x1xf32> -> vector<256x1xf32>
    %30 = vector.broadcast %29 : vector<256x1xf32> to vector<256x128xf32>
    %31 = arith.mulf %26, %30 : vector<256x128xf32>
    %cst_19 = arith.constant 5.000000e-01 : f32
    %32 = vector.broadcast %cst_19 : f32 to vector<256x128xf32>
    %33 = arith.mulf %32, %31 : vector<256x128xf32>
    %cst_20 = arith.constant 6.250000e-02 : f32
    %34 = vector.broadcast %cst_20 : f32 to vector<256x128xf32>
    %35 = arith.addf %33, %34 : vector<256x128xf32>
    %c0_21 = arith.constant 0 : index
    %c0_22 = arith.constant 0 : index
    %36 = vector.load %arg8[%c0_21, %c0_22] : memref<256x128xf32, #tpu.memory_space<vmem>>, vector<256x128xf32>
    tpu.vector_store %arg8[%c0_21, %c0_22], %35 {strides = array<i32>} : memref<256x128xf32, #tpu.memory_space<vmem>>, vector<256x128xf32>,
    return
  }
  func.func @transform_0(%arg0: i32) -> (i32, i32) {
    %c0_i32 = arith.constant 0 : i32
    %c0_i32_0 = arith.constant 0 : i32
    return %arg0, %c0_i32 : i32, i32
  }
  func.func @transform_1(%arg0: i32) -> (i32, i32) {
    %c0_i32 = arith.constant 0 : i32
    %c0_i32_0 = arith.constant 0 : i32
    %c0_i32_1 = arith.constant 0 : i32
    return %c0_i32, %c0_i32_0 : i32, i32
  }
  func.func @transform_2(%arg0: i32) -> (i32, i32) {
    %c0_i32 = arith.constant 0 : i32
    %c0_i32_0 = arith.constant 0 : i32
    %c0_i32_1 = arith.constant 0 : i32
    return %c0_i32, %c0_i32_0 : i32, i32
  }
  func.func @transform_3(%arg0: i32) -> (i32, i32) {
    %c0_i32 = arith.constant 0 : i32
    %c0_i32_0 = arith.constant 0 : i32
    %c0_i32_1 = arith.constant 0 : i32
    return %c0_i32, %c0_i32_0 : i32, i32
  }
  func.func @transform_4(%arg0: i32) -> (i32, i32) {
    %c0_i32 = arith.constant 0 : i32
    %c0_i32_0 = arith.constant 0 : i32
    %c0_i32_1 = arith.constant 0 : i32
    return %c0_i32, %c0_i32_0 : i32, i32
  }
  func.func @transform_5(%arg0: i32) -> (i32, i32) {
    %c0_i32 = arith.constant 0 : i32
    %c0_i32_0 = arith.constant 0 : i32
    %c0_i32_1 = arith.constant 0 : i32
    return %c0_i32, %c0_i32_0 : i32, i32
  }
  func.func @transform_6(%arg0: i32) -> (i32, i32) {
    %c0_i32 = arith.constant 0 : i32
    %c0_i32_0 = arith.constant 0 : i32
    %c0_i32_1 = arith.constant 0 : i32
    return %c0_i32, %c0_i32_0 : i32, i32
  }
  func.func @transform_7(%arg0: i32) -> (i32, i32) {
    %c0_i32 = arith.constant 0 : i32
    %c0_i32_0 = arith.constant 0 : i32
    return %arg0, %c0_i32 : i32, i32
  }
}

</mosaic_0001>

<llo_original>
// kernel: tpu_custom_call.1
$region0: #{tpu_custom_call.1}
  #allocation0 [shape = 'u32[]', space=smem, size = 0x4, offset = 0x4, fixed_abs, tag = 'smem constant byte address 0x4 - core index']
  #allocation1 [shape = 'u32[72,128]{1,0:T(1,128)}', space=vmem, size = 0x9000, scoped, tag = 'internal scratch']
  %s0 = inlined_call_operand.vmem [shape: f32[512,16], index: 0, kind: input, shape index: {}]
  %s1 = inlined_call_operand.vmem [shape: f32[16,32], index: 1, kind: input, shape index: {}]
  %s2 = inlined_call_operand.vmem [shape: f32[1,32], index: 2, kind: input, shape index: {}]
  %s3 = inlined_call_operand.vmem [shape: f32[32,32], index: 3, kind: input, shape index: {}]
  %s4 = inlined_call_operand.vmem [shape: f32[1,32], index: 4, kind: input, shape index: {}]
  %s5 = inlined_call_operand.vmem [shape: f32[32,128], index: 5, kind: input, shape index: {}]
  %s6 = inlined_call_operand.vmem [shape: f32[1,128], index: 6, kind: input, shape index: {}]
  %s7 = inlined_call_operand.hbm [shape: f32[512,128], index: 7, kind: output, shape index: {}]
  %s8 = sld [smem:[#allocation0]]
  $region61: #{tpu_custom_call.1} parent=0
    _
  %s10 = ssub.s32 1, %s8
  %s11 = scalar_select 0, %s10, %s8
  $region1: #{tpu_custom_call.1} parent=0
    #allocation2 [shape = 'u8[262144]{0}', space=vmem, size = 0x40000, scoped, tag = 'output window, operand 0']
    #allocation3 [shape = 's32[2]{0}', space=sflag, size = 0x8, scoped, tag = 'scoped memory for tpu_custom_call.1']
    %12 = vsyncpa [#allocation3], 0
    %s13 = scalar_lea.sflag [#allocation3], 1
    %14 = vsyncpa %s13, 0
    loop: start=0, step=1, limit=4
    $region2: #{tpu_custom_call.1} parent=1 // loop_pre_header
      _
    $region3: #{tpu_custom_call.1} parent=1 // loop_header
      %s16 = sphi 0, %s20
      %p17 = scmp.ge.s32.totalorder %s16, 4
      %s26 = sphi 0, %s28
      %s29 = sphi 0, %s26
      %s30 = sphi 0, %s29
      %s46 = sphi 0, %s30
      %s50 = sphi 0, %s50
      %s52 = sphi 0, %s50
      %s53 = sphi 0, %s52
      %s67 = sphi 0, %s53
      %s71 = sphi 0, %s71
      %s73 = sphi 0, %s71
      %s74 = sphi 0, %s73
      %s88 = sphi 0, %s74
      %s92 = sphi 0, %s92
      %s94 = sphi 0, %s92
      %s95 = sphi 0, %s94
      %s109 = sphi 0, %s95
      %s113 = sphi 0, %s113
      %s115 = sphi 0, %s113
      %s116 = sphi 0, %s115
      %s130 = sphi 0, %s116
      %s134 = sphi 0, %s134
      %s136 = sphi 0, %s134
      %s137 = sphi 0, %s136
      %s151 = sphi 0, %s137
      %s155 = sphi 0, %s155
      %s157 = sphi 0, %s155
      %s158 = sphi 0, %s157
      %s172 = sphi 0, %s158
      %s178 = sphi 0, %s180
      %s181 = sphi 0, %s178
      %s182 = sphi 0, %s181
      %s198 = sphi 0, %s182
    $region4: #{tpu_custom_call.1} parent=1 // loop_header_branch
      %19 = sbr.rel (%p17) target = $region8
    $region5: #{tpu_custom_call.1} parent=1 // loop_body
      %s21 = ssub.s32 %s16, 1
      %s22 = ssub.s32 %s16, 2
      %s23 = sadd.s32 %s16, 1
      %s24 = ssub.s32 %s16, %s23
      %p25 = scmp.eq.s32.totalorder %s24, 0
      %s27 = sadd.s32 %s26, 1
      %s28 = scalar_select %p25, %s26, %s27
      %p31 = pneg %p25
      %p32 = scmp.eq.s32.totalorder %s16, 1
      %p33 = por %p31, %p32
      %p34 = scmp.ne.s32.totalorder %s26, %s29
      %p35 = scmp.eq.s32.totalorder %s16, 0
      %p36 = por %p34, %p35
      %p37 = scmp.ne.s32.totalorder %s26, %s29
      %p38 = scmp.eq.s32.totalorder %s21, 1
      %p39 = por %p37, %p38
      %p40 = scmp.ne.s32.totalorder %s29, %s30
      %p41 = scmp.eq.s32.totalorder %s21, 0
      %p42 = por %p40, %p41
      %p43 = scmp.ne.s32.totalorder %s29, %s30
      %p44 = scmp.eq.s32.totalorder %s22, 1
      %p45 = por %p43, %p44
      %p47 = scmp.ne.s32.totalorder %s30, %s46
      %p48 = scmp.eq.s32.totalorder %s22, 0
      %p49 = por %p47, %p48
      %s51 = sadd.s32 %s50, 1
      %p54 = scmp.eq.s32.totalorder %s16, 1
      %p55 = scmp.ne.s32.totalorder %s50, %s52
      %p56 = scmp.eq.s32.totalorder %s16, 0
      %p57 = por %p55, %p56
      %p58 = scmp.ne.s32.totalorder %s50, %s52
      %p59 = scmp.eq.s32.totalorder %s21, 1
      %p60 = por %p58, %p59
      %p61 = scmp.ne.s32.totalorder %s52, %s53
      %p62 = scmp.eq.s32.totalorder %s21, 0
      %p63 = por %p61, %p62
      %p64 = scmp.ne.s32.totalorder %s52, %s53
      %p65 = scmp.eq.s32.totalorder %s22, 1
      %p66 = por %p64, %p65
      %p68 = scmp.ne.s32.totalorder %s53, %s67
      %p69 = scmp.eq.s32.totalorder %s22, 0
      %p70 = por %p68, %p69
      %s72 = sadd.s32 %s71, 1
      %p75 = scmp.eq.s32.totalorder %s16, 1
      %p76 = scmp.ne.s32.totalorder %s71, %s73
      %p77 = scmp.eq.s32.totalorder %s16, 0
      %p78 = por %p76, %p77
      %p79 = scmp.ne.s32.totalorder %s71, %s73
      %p80 = scmp.eq.s32.totalorder %s21, 1
      %p81 = por %p79, %p80
      %p82 = scmp.ne.s32.totalorder %s73, %s74
      %p83 = scmp.eq.s32.totalorder %s21, 0
      %p84 = por %p82, %p83
      %p85 = scmp.ne.s32.totalorder %s73, %s74
      %p86 = scmp.eq.s32.totalorder %s22, 1
      %p87 = por %p85, %p86
      %p89 = scmp.ne.s32.totalorder %s74, %s88
      %p90 = scmp.eq.s32.totalorder %s22, 0
      %p91 = por %p89, %p90
      %s93 = sadd.s32 %s92, 1
      %p96 = scmp.eq.s32.totalorder %s16, 1
      %p97 = scmp.ne.s32.totalorder %s92, %s94
      %p98 = scmp.eq.s32.totalorder %s16, 0
      %p99 = por %p97, %p98
      %p100 = scmp.ne.s32.totalorder %s92, %s94
      %p101 = scmp.eq.s32.totalorder %s21, 1
      %p102 = por %p100, %p101
      %p103 = scmp.ne.s32.totalorder %s94, %s95
      %p104 = scmp.eq.s32.totalorder %s21, 0
      %p105 = por %p103, %p104
      %p106 = scmp.ne.s32.totalorder %s94, %s95
      %p107 = scmp.eq.s32.totalorder %s22, 1
      %p108 = por %p106, %p107
      %p110 = scmp.ne.s32.totalorder %s95, %s109
      %p111 = scmp.eq.s32.totalorder %s22, 0
      %p112 = por %p110, %p111
      %s114 = sadd.s32 %s113, 1
      %p117 = scmp.eq.s32.totalorder %s16, 1
      %p118 = scmp.ne.s32.totalorder %s113, %s115
      %p119 = scmp.eq.s32.totalorder %s16, 0
      %p120 = por %p118, %p119
      %p121 = scmp.ne.s32.totalorder %s113, %s115
      %p122 = scmp.eq.s32.totalorder %s21, 1
      %p123 = por %p121, %p122
      %p124 = scmp.ne.s32.totalorder %s115, %s116
      %p125 = scmp.eq.s32.totalorder %s21, 0
      %p126 = por %p124, %p125
      %p127 = scmp.ne.s32.totalorder %s115, %s116
      %p128 = scmp.eq.s32.totalorder %s22, 1
      %p129 = por %p127, %p128
      %p131 = scmp.ne.s32.totalorder %s116, %s130
      %p132 = scmp.eq.s32.totalorder %s22, 0
      %p133 = por %p131, %p132
      %s135 = sadd.s32 %s134, 1
      %p138 = scmp.eq.s32.totalorder %s16, 1
      %p139 = scmp.ne.s32.totalorder %s134, %s136
      %p140 = scmp.eq.s32.totalorder %s16, 0
      %p141 = por %p139, %p140
      %p142 = scmp.ne.s32.totalorder %s134, %s136
      %p143 = scmp.eq.s32.totalorder %s21, 1
      %p144 = por %p142, %p143
      %p145 = scmp.ne.s32.totalorder %s136, %s137
      %p146 = scmp.eq.s32.totalorder %s21, 0
      %p147 = por %p145, %p146
      %p148 = scmp.ne.s32.totalorder %s136, %s137
      %p149 = scmp.eq.s32.totalorder %s22, 1
      %p150 = por %p148, %p149
      %p152 = scmp.ne.s32.totalorder %s137, %s151
      %p153 = scmp.eq.s32.totalorder %s22, 0
      %p154 = por %p152, %p153
      %s156 = sadd.s32 %s155, 1
      %p159 = scmp.eq.s32.totalorder %s16, 1
      %p160 = scmp.ne.s32.totalorder %s155, %s157
      %p161 = scmp.eq.s32.totalorder %s16, 0
      %p162 = por %p160, %p161
      %p163 = scmp.ne.s32.totalorder %s155, %s157
      %p164 = scmp.eq.s32.totalorder %s21, 1
      %p165 = por %p163, %p164
      %p166 = scmp.ne.s32.totalorder %s157, %s158
      %p167 = scmp.eq.s32.totalorder %s21, 0
      %p168 = por %p166, %p167
      %p169 = scmp.ne.s32.totalorder %s157, %s158
      %p170 = scmp.eq.s32.totalorder %s22, 1
      %p171 = por %p169, %p170
      %p173 = scmp.ne.s32.totalorder %s158, %s172
      %p174 = scmp.eq.s32.totalorder %s22, 0
      %p175 = por %p173, %p174
      %s176 = ssub.s32 %s16, %s23
      %p177 = scmp.eq.s32.totalorder %s176, 0
      %s179 = sadd.s32 %s178, 1
      %s180 = scalar_select %p177, %s178, %s179
      %p183 = pneg %p177
      %p184 = scmp.eq.s32.totalorder %s16, 1
      %p185 = por %p183, %p184
      %p186 = scmp.ne.s32.totalorder %s178, %s181
      %p187 = scmp.eq.s32.totalorder %s16, 0
      %p188 = por %p186, %p187
      %p189 = scmp.ne.s32.totalorder %s178, %s181
      %p190 = scmp.eq.s32.totalorder %s21, 1
      %p191 = por %p189, %p190
      %p192 = scmp.ne.s32.totalorder %s181, %s182
      %p193 = scmp.eq.s32.totalorder %s21, 0
      %p194 = por %p192, %p193
      %p195 = scmp.ne.s32.totalorder %s181, %s182
      %p196 = scmp.eq.s32.totalorder %s22, 1
      %p197 = por %p195, %p196
      %p199 = scmp.ne.s32.totalorder %s182, %s198
      %p200 = scmp.eq.s32.totalorder %s22, 0
      %p201 = por %p199, %p200
      %p202 = scmp.le.s32.totalorder 1, %s16
      %p203 = scmp.lt.s32.totalorder %s16, 3
      %p204 = pnand %p202, %p203
      %p205 = pneg %p204
      // Predicated region
      $region9: #{tpu_custom_call.1} parent=5 // pred_check
        _
      $region10: #{tpu_custom_call.1} parent=5 // pred_check_branch
        %207 = sbr.rel (%p204) target = $region12
      $region11: #{tpu_custom_call.1} parent=5 // pred_region
        %s208 = ssub.s32 %s16, 1
        // Predicated region
        $region13: #{tpu_custom_call.1} parent=11 // pred_check
          %p209 = pneg %p63
        $region14: #{tpu_custom_call.1} parent=11 // pred_check_branch
          %211 = sbr.rel (%p209) target = $region16
        $region15: #{tpu_custom_call.1} parent=11 // pred_region
          _
        $region16: #{tpu_custom_call.1} parent=11 // pred_fallthru
          _
        // Predicated region
        $region17: #{tpu_custom_call.1} parent=11 // pred_check
          %p212 = pneg %p84
        $region18: #{tpu_custom_call.1} parent=11 // pred_check_branch
          %214 = sbr.rel (%p212) target = $region20
        $region19: #{tpu_custom_call.1} parent=11 // pred_region
          _
        $region20: #{tpu_custom_call.1} parent=11 // pred_fallthru
          _
        // Predicated region
        $region21: #{tpu_custom_call.1} parent=11 // pred_check
          %p215 = pneg %p105
        $region22: #{tpu_custom_call.1} parent=11 // pred_check_branch
          %217 = sbr.rel (%p215) target = $region24
        $region23: #{tpu_custom_call.1} parent=11 // pred_region
          _
        $region24: #{tpu_custom_call.1} parent=11 // pred_fallthru
          _
        // Predicated region
        $region25: #{tpu_custom_call.1} parent=11 // pred_check
          %p218 = pneg %p126
        $region26: #{tpu_custom_call.1} parent=11 // pred_check_branch
          %220 = sbr.rel (%p218) target = $region28
        $region27: #{tpu_custom_call.1} parent=11 // pred_region
          _
        $region28: #{tpu_custom_call.1} parent=11 // pred_fallthru
          _
        // Predicated region
        $region29: #{tpu_custom_call.1} parent=11 // pred_check
          %p221 = pneg %p147
        $region30: #{tpu_custom_call.1} parent=11 // pred_check_branch
          %223 = sbr.rel (%p221) target = $region32
        $region31: #{tpu_custom_call.1} parent=11 // pred_region
          _
        $region32: #{tpu_custom_call.1} parent=11 // pred_fallthru
          _
        // Predicated region
        $region33: #{tpu_custom_call.1} parent=11 // pred_check
          %p224 = pneg %p168
        $region34: #{tpu_custom_call.1} parent=11 // pred_check_branch
          %226 = sbr.rel (%p224) target = $region36
        $region35: #{tpu_custom_call.1} parent=11 // pred_region
          _
        $region36: #{tpu_custom_call.1} parent=11 // pred_fallthru
          _
      $region12: #{tpu_custom_call.1} parent=5 // pred_fallthru
        _
      %p227 = scmp.lt.s32.totalorder %s16, 2
      // Predicated region
      $region37: #{tpu_custom_call.1} parent=5 // pred_check
        %p228 = pneg %p227
      $region38: #{tpu_custom_call.1} parent=5 // pred_check_branch
        %230 = sbr.rel (%p228) target = $region40
      $region39: #{tpu_custom_call.1} parent=5 // pred_region
        // Predicated region
        $region41: #{tpu_custom_call.1} parent=39 // pred_check
          %p231 = pneg %p36
        $region42: #{tpu_custom_call.1} parent=39 // pred_check_branch
          %233 = sbr.rel (%p231) target = $region44
        $region43: #{tpu_custom_call.1} parent=39 // pred_region
          %s234 = smul.u32 32, %s16
          %p235 = scmp.lt.s32.totalorder %s234, 63
          %s236 = scalar_select %p235, %s234, 63
          %s237 = smul.addr %s236, 8
          %s238 = scalar_lea.vmem %s0, %s237
          %s239 = smul.u32 32, %s16
        $region44: #{tpu_custom_call.1} parent=39 // pred_fallthru
          _
      $region40: #{tpu_custom_call.1} parent=5 // pred_fallthru
        _
      %p240 = scmp.le.s32.totalorder 1, %s16
      %p241 = scmp.lt.s32.totalorder %s16, 3
      %p242 = pnand %p240, %p241
      %p243 = pneg %p242
      // Predicated region
      $region45: #{tpu_custom_call.1} parent=5 // pred_check
        _
      $region46: #{tpu_custom_call.1} parent=5 // pred_check_branch
        %245 = sbr.rel (%p242) target = $region48
      $region47: #{tpu_custom_call.1} parent=5 // pred_region
        %s246 = ssub.s32 %s16, 1
        %s247 = smul.u32 32, %s21
        %p248 = scmp.lt.s32.totalorder %s247, 63
        %s249 = scalar_select %p248, %s247, 63
        %s250 = smul.addr %s249, 8
        %s251 = scalar_lea.vmem %s0, %s250
        %p252 = pneg %p42
        %p253 = pneg %p39
        %p254 = pneg %p63
        %p255 = pneg %p60
        %p256 = pneg %p84
        %p257 = pneg %p81
        %p258 = pneg %p105
        %p259 = pneg %p102
        %p260 = pneg %p126
        %p261 = pneg %p123
        %p262 = pneg %p147
        %p263 = pneg %p144
        %p264 = pneg %p168
        %p265 = pneg %p165
        %p266 = pneg %p194
        %p267 = pneg %p191
        %s268 = sand.u32 %s181, 1
        %s269 = scalar_lea.sflag [#allocation3], %s268
        %s270 = sand.u32 %s181, 1
        %s271 = smul.addr %s270, 256
        %s272 = scalar_lea.vmem [#allocation2], %s271
        %s273 = smul.u32 32, %s21
        %p274 = scmp.lt.s32.totalorder %s273, 63
        %s275 = scalar_select %p274, %s273, 63
        %s276 = smul.addr %s275, 8
        %s277 = scalar_lea.vmem %s0, %s276
        %s278 = smul.u32 32, %s21
        %s279 = smul.u32 32, %s21
        %v280 = vld [vmem:[%s277] sm:$0xff]
        %v281 = vld [vmem:[%s277 + $0x8] sm:$0xff]
        %v282 = vld [vmem:[%s277 + $0x10] sm:$0xff]
        %v283 = vld [vmem:[%s277 + $0x18] sm:$0xff]
        %v284 = vld [vmem:[%s277 + $0x20] sm:$0xff]
        %v285 = vld [vmem:[%s277 + $0x28] sm:$0xff]
        %v286 = vld [vmem:[%s277 + $0x30] sm:$0xff]
        %v287 = vld [vmem:[%s277 + $0x38] sm:$0xff]
        %v288 = vld [vmem:[%s277 + $0x40] sm:$0xff]
        %v289 = vld [vmem:[%s277 + $0x48] sm:$0xff]
        %v290 = vld [vmem:[%s277 + $0x50] sm:$0xff]
        %v291 = vld [vmem:[%s277 + $0x58] sm:$0xff]
        %v292 = vld [vmem:[%s277 + $0x60] sm:$0xff]
        %v293 = vld [vmem:[%s277 + $0x68] sm:$0xff]
        %v294 = vld [vmem:[%s277 + $0x70] sm:$0xff]
        %v295 = vld [vmem:[%s277 + $0x78] sm:$0xff]
        %v296 = vld [vmem:[%s277 + $0x80] sm:$0xff]
        %v297 = vld [vmem:[%s277 + $0x88] sm:$0xff]
        %v298 = vld [vmem:[%s277 + $0x90] sm:$0xff]
        %v299 = vld [vmem:[%s277 + $0x98] sm:$0xff]
        %v300 = vld [vmem:[%s277 + $0xa0] sm:$0xff]
        %v301 = vld [vmem:[%s277 + $0xa8] sm:$0xff]
        %v302 = vld [vmem:[%s277 + $0xb0] sm:$0xff]
        %v303 = vld [vmem:[%s277 + $0xb8] sm:$0xff]
        %v304 = vld [vmem:[%s277 + $0xc0] sm:$0xff]
        %v305 = vld [vmem:[%s277 + $0xc8] sm:$0xff]
        %v306 = vld [vmem:[%s277 + $0xd0] sm:$0xff]
        %v307 = vld [vmem:[%s277 + $0xd8] sm:$0xff]
        %v308 = vld [vmem:[%s277 + $0xe0] sm:$0xff]
        %v309 = vld [vmem:[%s277 + $0xe8] sm:$0xff]
        %v310 = vld [vmem:[%s277 + $0xf0] sm:$0xff]
        %v311 = vld [vmem:[%s277 + $0xf8] sm:$0xff]
        %v312 = vld [vmem:[%s1] sm:$0xff]
        %v313 = vld [vmem:[%s1 + $0x8] sm:$0xff]
        %v314 = vld [vmem:[%s2] sm:$0x1]
        %v316 = vperm.slane %v314, 0
        %vm318 = vcmask 130048
        %v320 = vsel %vm318, %v280, 0
        %v323 = vsel %vm318, %v281, 0
        %v326 = vsel %vm318, %v282, 0
        %v329 = vsel %vm318, %v283, 0
        %v332 = vsel %vm318, %v284, 0
        %v335 = vsel %vm318, %v285, 0
        %v338 = vsel %vm318, %v286, 0
        %v341 = vsel %vm318, %v287, 0
        %v344 = vsel %vm318, %v288, 0
        %v347 = vsel %vm318, %v289, 0
        %v350 = vsel %vm318, %v290, 0
        %v353 = vsel %vm318, %v291, 0
        %v356 = vsel %vm318, %v292, 0
        %v359 = vsel %vm318, %v293, 0
        %v362 = vsel %vm318, %v294, 0
        %v365 = vsel %vm318, %v295, 0
        %v368 = vsel %vm318, %v296, 0
        %v371 = vsel %vm318, %v297, 0
        %v374 = vsel %vm318, %v298, 0
        %v377 = vsel %vm318, %v299, 0
        %v380 = vsel %vm318, %v300, 0
        %v383 = vsel %vm318, %v301, 0
        %v386 = vsel %vm318, %v302, 0
        %v389 = vsel %vm318, %v303, 0
        %v392 = vsel %vm318, %v304, 0
        %v395 = vsel %vm318, %v305, 0
        %v398 = vsel %vm318, %v306, 0
        %v401 = vsel %vm318, %v307, 0
        %v404 = vsel %vm318, %v308, 0
        %v407 = vsel %vm318, %v309, 0
        %v410 = vsel %vm318, %v310, 0
        %v413 = vsel %vm318, %v311, 0
        %415 = vmatpush.msra.mxu0 0.0
        %416 = vmatpush.msra.mxu0 0.0
        %417 = vmatpush.msra.mxu0 0.0
        %418 = vmatpush.msra.mxu0 0.0
        %419 = vmatpush.msra.mxu0 0.0
        %420 = vmatpush.msra.mxu0 0.0
        %421 = vmatpush.msra.mxu0 0.0
        %422 = vmatpush.msra.mxu0 0.0
        %423 = vmatpush.msra.mxu0 0.0
        %424 = vmatpush.msra.mxu0 0.0
        %425 = vmatpush.msra.mxu0 0.0
        %426 = vmatpush.msra.mxu0 0.0
        %427 = vmatpush.msra.mxu0 0.0
        %428 = vmatpush.msra.mxu0 0.0
        %429 = vmatpush.msra.mxu0 %v313
        %430 = vmatpush.msra.mxu0 %v312
        %431 = vmatmul.f32.gmra.mxu0 %v320
        %v432 = vpop.f32.mrf.mxu0
        %v433 = vadd.f32 %v316, %v432
        %434 = vmatmul.f32.gmra.mxu0 %v323
        %v435 = vpop.f32.mrf.mxu0
        %v436 = vadd.f32 %v316, %v435
        %437 = vmatmul.f32.gmra.mxu0 %v326
        %v438 = vpop.f32.mrf.mxu0
        %v439 = vadd.f32 %v316, %v438
        %440 = vmatmul.f32.gmra.mxu0 %v329
        %v441 = vpop.f32.mrf.mxu0
        %v442 = vadd.f32 %v316, %v441
        %443 = vmatmul.f32.gmra.mxu0 %v332
        %v444 = vpop.f32.mrf.mxu0
        %v445 = vadd.f32 %v316, %v444
        %446 = vmatmul.f32.gmra.mxu0 %v335
        %v447 = vpop.f32.mrf.mxu0
        %v448 = vadd.f32 %v316, %v447
        %449 = vmatmul.f32.gmra.mxu0 %v338
        %v450 = vpop.f32.mrf.mxu0
        %v451 = vadd.f32 %v316, %v450
        %452 = vmatmul.f32.gmra.mxu0 %v341
        %v453 = vpop.f32.mrf.mxu0
        %v454 = vadd.f32 %v316, %v453
        %455 = vmatmul.f32.gmra.mxu0 %v344
        %v456 = vpop.f32.mrf.mxu0
        %v457 = vadd.f32 %v316, %v456
        %458 = vmatmul.f32.gmra.mxu0 %v347
        %v459 = vpop.f32.mrf.mxu0
        %v460 = vadd.f32 %v316, %v459
        %461 = vmatmul.f32.gmra.mxu0 %v350
        %v462 = vpop.f32.mrf.mxu0
        %v463 = vadd.f32 %v316, %v462
        %464 = vmatmul.f32.gmra.mxu0 %v353
        %v465 = vpop.f32.mrf.mxu0
        %v466 = vadd.f32 %v316, %v465
        %467 = vmatmul.f32.gmra.mxu0 %v356
        %v468 = vpop.f32.mrf.mxu0
        %v469 = vadd.f32 %v316, %v468
        %470 = vmatmul.f32.gmra.mxu0 %v359
        %v471 = vpop.f32.mrf.mxu0
        %v472 = vadd.f32 %v316, %v471
        %473 = vmatmul.f32.gmra.mxu0 %v362
        %v474 = vpop.f32.mrf.mxu0
        %v475 = vadd.f32 %v316, %v474
        %476 = vmatmul.f32.gmra.mxu0 %v365
        %v477 = vpop.f32.mrf.mxu0
        %v478 = vadd.f32 %v316, %v477
        %479 = vmatmul.f32.gmra.mxu0 %v368
        %v480 = vpop.f32.mrf.mxu0
        %v481 = vadd.f32 %v316, %v480
        %482 = vmatmul.f32.gmra.mxu0 %v371
        %v483 = vpop.f32.mrf.mxu0
        %v484 = vadd.f32 %v316, %v483
        %485 = vmatmul.f32.gmra.mxu0 %v374
        %v486 = vpop.f32.mrf.mxu0
        %v487 = vadd.f32 %v316, %v486
        %488 = vmatmul.f32.gmra.mxu0 %v377
        %v489 = vpop.f32.mrf.mxu0
        %v490 = vadd.f32 %v316, %v489
        %491 = vmatmul.f32.gmra.mxu0 %v380
        %v492 = vpop.f32.mrf.mxu0
        %v493 = vadd.f32 %v316, %v492
        %494 = vmatmul.f32.gmra.mxu0 %v383
        %v495 = vpop.f32.mrf.mxu0
        %v496 = vadd.f32 %v316, %v495
        %497 = vmatmul.f32.gmra.mxu0 %v386
        %v498 = vpop.f32.mrf.mxu0
        %v499 = vadd.f32 %v316, %v498
        %500 = vmatmul.f32.gmra.mxu0 %v389
        %v501 = vpop.f32.mrf.mxu0
        %v502 = vadd.f32 %v316, %v501
        %503 = vmatmul.f32.gmra.mxu0 %v392
        %v504 = vpop.f32.mrf.mxu0
        %v505 = vadd.f32 %v316, %v504
        %506 = vmatmul.f32.gmra.mxu0 %v395
        %v507 = vpop.f32.mrf.mxu0
        %v508 = vadd.f32 %v316, %v507
        %509 = vmatmul.f32.gmra.mxu0 %v398
        %v510 = vpop.f32.mrf.mxu0
        %v511 = vadd.f32 %v316, %v510
        %512 = vmatmul.f32.gmra.mxu0 %v401
        %v513 = vpop.f32.mrf.mxu0
        %v514 = vadd.f32 %v316, %v513
        %515 = vmatmul.f32.gmra.mxu0 %v404
        %v516 = vpop.f32.mrf.mxu0
        %v517 = vadd.f32 %v316, %v516
        %518 = vmatmul.f32.gmra.mxu0 %v407
        %v519 = vpop.f32.mrf.mxu0
        %v520 = vadd.f32 %v316, %v519
        %521 = vmatmul.f32.gmra.mxu0 %v410
        %v522 = vpop.f32.mrf.mxu0
        %v523 = vadd.f32 %v316, %v522
        %524 = vmatmul.f32.gmra.mxu0 %v413
        %v525 = vpop.f32.mrf.mxu0
        %v526 = vadd.f32 %v316, %v525
        %527 = vdwg.mxu0
        %v528 = vmul.f32 %v433, 0.01
        %v529 = vmul.f32 %v436, 0.01
        %v530 = vmul.f32 %v439, 0.01
        %v531 = vmul.f32 %v442, 0.01
        %v532 = vmul.f32 %v445, 0.01
        %v533 = vmul.f32 %v448, 0.01
        %v534 = vmul.f32 %v451, 0.01
        %v535 = vmul.f32 %v454, 0.01
        %v536 = vmul.f32 %v457, 0.01
        %v537 = vmul.f32 %v460, 0.01
        %v538 = vmul.f32 %v463, 0.01
        %v539 = vmul.f32 %v466, 0.01
        %v540 = vmul.f32 %v469, 0.01
        %v541 = vmul.f32 %v472, 0.01
        %v542 = vmul.f32 %v475, 0.01
        %v543 = vmul.f32 %v478, 0.01
        %v544 = vmul.f32 %v481, 0.01
        %v545 = vmul.f32 %v484, 0.01
        %v546 = vmul.f32 %v487, 0.01
        %v547 = vmul.f32 %v490, 0.01
        %v548 = vmul.f32 %v493, 0.01
        %v549 = vmul.f32 %v496, 0.01
        %v550 = vmul.f32 %v499, 0.01
        %v551 = vmul.f32 %v502, 0.01
        %v552 = vmul.f32 %v505, 0.01
        %v553 = vmul.f32 %v508, 0.01
        %v554 = vmul.f32 %v511, 0.01
        %v555 = vmul.f32 %v514, 0.01
        %v556 = vmul.f32 %v517, 0.01
        %v557 = vmul.f32 %v520, 0.01
        %v558 = vmul.f32 %v523, 0.01
        %v559 = vmul.f32 %v526, 0.01
        %v560 = vmax.f32 %v433, %v528
        %v561 = vmax.f32 %v436, %v529
        %v562 = vmax.f32 %v439, %v530
        %v563 = vmax.f32 %v442, %v531
        %v564 = vmax.f32 %v445, %v532
        %v565 = vmax.f32 %v448, %v533
        %v566 = vmax.f32 %v451, %v534
        %v567 = vmax.f32 %v454, %v535
        %v568 = vmax.f32 %v457, %v536
        %v569 = vmax.f32 %v460, %v537
        %v570 = vmax.f32 %v463, %v538
        %v571 = vmax.f32 %v466, %v539
        %v572 = vmax.f32 %v469, %v540
        %v573 = vmax.f32 %v472, %v541
        %v574 = vmax.f32 %v475, %v542
        %v575 = vmax.f32 %v478, %v543
        %v576 = vmax.f32 %v481, %v544
        %v577 = vmax.f32 %v484, %v545
        %v578 = vmax.f32 %v487, %v546
        %v579 = vmax.f32 %v490, %v547
        %v580 = vmax.f32 %v493, %v548
        %v581 = vmax.f32 %v496, %v549
        %v582 = vmax.f32 %v499, %v550
        %v583 = vmax.f32 %v502, %v551
        %v584 = vmax.f32 %v505, %v552
        %v585 = vmax.f32 %v508, %v553
        %v586 = vmax.f32 %v511, %v554
        %v587 = vmax.f32 %v514, %v555
        %v588 = vmax.f32 %v517, %v556
        %v589 = vmax.f32 %v520, %v557
        %v590 = vmax.f32 %v523, %v558
        %v591 = vmax.f32 %v526, %v559
        %v592 = vld [vmem:[%s3] sm:$0xff]
        %v593 = vld [vmem:[%s3 + $0x8] sm:$0xff]
        %v594 = vld [vmem:[%s3 + $0x10] sm:$0xff]
        %v595 = vld [vmem:[%s3 + $0x18] sm:$0xff]
        %v596 = vld [vmem:[%s4] sm:$0x1]
        %v598 = vperm.slane %v596, 0
        %vm600 = vcmask 261120
        %v602 = vsel %vm600, %v560, 0
        %v605 = vsel %vm600, %v561, 0
        %v608 = vsel %vm600, %v562, 0
        %v611 = vsel %vm600, %v563, 0
        %v614 = vsel %vm600, %v564, 0
        %v617 = vsel %vm600, %v565, 0
        %v620 = vsel %vm600, %v566, 0
        %v623 = vsel %vm600, %v567, 0
        %v626 = vsel %vm600, %v568, 0
        %v629 = vsel %vm600, %v569, 0
        %v632 = vsel %vm600, %v570, 0
        %v635 = vsel %vm600, %v571, 0
        %v638 = vsel %vm600, %v572, 0
        %v641 = vsel %vm600, %v573, 0
        %v644 = vsel %vm600, %v574, 0
        %v647 = vsel %vm600, %v575, 0
        %v650 = vsel %vm600, %v576, 0
        %v653 = vsel %vm600, %v577, 0
        %v656 = vsel %vm600, %v578, 0
        %v659 = vsel %vm600, %v579, 0
        %v662 = vsel %vm600, %v580, 0
        %v665 = vsel %vm600, %v581, 0
        %v668 = vsel %vm600, %v582, 0
        %v671 = vsel %vm600, %v583, 0
        %v674 = vsel %vm600, %v584, 0
        %v677 = vsel %vm600, %v585, 0
        %v680 = vsel %vm600, %v586, 0
        %v683 = vsel %vm600, %v587, 0
        %v686 = vsel %vm600, %v588, 0
        %v689 = vsel %vm600, %v589, 0
        %v692 = vsel %vm600, %v590, 0
        %v695 = vsel %vm600, %v591, 0
        %697 = vmatpush.msra.mxu0 0.0
        %698 = vmatpush.msra.mxu0 0.0
        %699 = vmatpush.msra.mxu0 0.0
        %700 = vmatpush.msra.mxu0 0.0
        %701 = vmatpush.msra.mxu0 0.0
        %702 = vmatpush.msra.mxu0 0.0
        %703 = vmatpush.msra.mxu0 0.0
        %704 = vmatpush.msra.mxu0 0.0
        %705 = vmatpush.msra.mxu0 0.0
        %706 = vmatpush.msra.mxu0 0.0
        %707 = vmatpush.msra.mxu0 0.0
        %708 = vmatpush.msra.mxu0 0.0
        %709 = vmatpush.msra.mxu0 %v595
        %710 = vmatpush.msra.mxu0 %v594
        %711 = vmatpush.msra.mxu0 %v593
        %712 = vmatpush.msra.mxu0 %v592
        %713 = vmatmul.f32.gmra.mxu0 %v602
        %v714 = vpop.f32.mrf.mxu0
        %v715 = vadd.f32 %v598, %v714
        %716 = vmatmul.f32.gmra.mxu0 %v605
        %v717 = vpop.f32.mrf.mxu0
        %v718 = vadd.f32 %v598, %v717
        %719 = vmatmul.f32.gmra.mxu0 %v608
        %v720 = vpop.f32.mrf.mxu0
        %v721 = vadd.f32 %v598, %v720
        %722 = vmatmul.f32.gmra.mxu0 %v611
        %v723 = vpop.f32.mrf.mxu0
        %v724 = vadd.f32 %v598, %v723
        %725 = vmatmul.f32.gmra.mxu0 %v614
        %v726 = vpop.f32.mrf.mxu0
        %v727 = vadd.f32 %v598, %v726
        %728 = vmatmul.f32.gmra.mxu0 %v617
        %v729 = vpop.f32.mrf.mxu0
        %v730 = vadd.f32 %v598, %v729
        %731 = vmatmul.f32.gmra.mxu0 %v620
        %v732 = vpop.f32.mrf.mxu0
        %v733 = vadd.f32 %v598, %v732
        %734 = vmatmul.f32.gmra.mxu0 %v623
        %v735 = vpop.f32.mrf.mxu0
        %v736 = vadd.f32 %v598, %v735
        %737 = vmatmul.f32.gmra.mxu0 %v626
        %v738 = vpop.f32.mrf.mxu0
        %v739 = vadd.f32 %v598, %v738
        %740 = vmatmul.f32.gmra.mxu0 %v629
        %v741 = vpop.f32.mrf.mxu0
        %v742 = vadd.f32 %v598, %v741
        %743 = vmatmul.f32.gmra.mxu0 %v632
        %v744 = vpop.f32.mrf.mxu0
        %v745 = vadd.f32 %v598, %v744
        %746 = vmatmul.f32.gmra.mxu0 %v635
        %v747 = vpop.f32.mrf.mxu0
        %v748 = vadd.f32 %v598, %v747
        %749 = vmatmul.f32.gmra.mxu0 %v638
        %v750 = vpop.f32.mrf.mxu0
        %v751 = vadd.f32 %v598, %v750
        %752 = vmatmul.f32.gmra.mxu0 %v641
        %v753 = vpop.f32.mrf.mxu0
        %v754 = vadd.f32 %v598, %v753
        %755 = vmatmul.f32.gmra.mxu0 %v644
        %v756 = vpop.f32.mrf.mxu0
        %v757 = vadd.f32 %v598, %v756
        %758 = vmatmul.f32.gmra.mxu0 %v647
        %v759 = vpop.f32.mrf.mxu0
        %v760 = vadd.f32 %v598, %v759
        %761 = vmatmul.f32.gmra.mxu0 %v650
        %v762 = vpop.f32.mrf.mxu0
        %v763 = vadd.f32 %v598, %v762
        %764 = vmatmul.f32.gmra.mxu0 %v653
        %v765 = vpop.f32.mrf.mxu0
        %v766 = vadd.f32 %v598, %v765
        %767 = vmatmul.f32.gmra.mxu0 %v656
        %v768 = vpop.f32.mrf.mxu0
        %v769 = vadd.f32 %v598, %v768
        %770 = vmatmul.f32.gmra.mxu0 %v659
        %v771 = vpop.f32.mrf.mxu0
        %v772 = vadd.f32 %v598, %v771
        %773 = vmatmul.f32.gmra.mxu0 %v662
        %v774 = vpop.f32.mrf.mxu0
        %v775 = vadd.f32 %v598, %v774
        %776 = vmatmul.f32.gmra.mxu0 %v665
        %v777 = vpop.f32.mrf.mxu0
        %v778 = vadd.f32 %v598, %v777
        %779 = vmatmul.f32.gmra.mxu0 %v668
        %v780 = vpop.f32.mrf.mxu0
        %v781 = vadd.f32 %v598, %v780
        %782 = vmatmul.f32.gmra.mxu0 %v671
        %v783 = vpop.f32.mrf.mxu0
        %v784 = vadd.f32 %v598, %v783
        %785 = vmatmul.f32.gmra.mxu0 %v674
        %v786 = vpop.f32.mrf.mxu0
        %v787 = vadd.f32 %v598, %v786
        %788 = vmatmul.f32.gmra.mxu0 %v677
        %v789 = vpop.f32.mrf.mxu0
        %v790 = vadd.f32 %v598, %v789
        %791 = vmatmul.f32.gmra.mxu0 %v680
        %v792 = vpop.f32.mrf.mxu0
        %v793 = vadd.f32 %v598, %v792
        %794 = vmatmul.f32.gmra.mxu0 %v683
        %v795 = vpop.f32.mrf.mxu0
        %v796 = vadd.f32 %v598, %v795
        %797 = vmatmul.f32.gmra.mxu0 %v686
        %v798 = vpop.f32.mrf.mxu0
        %v799 = vadd.f32 %v598, %v798
        %800 = vmatmul.f32.gmra.mxu0 %v689
        %v801 = vpop.f32.mrf.mxu0
        %v802 = vadd.f32 %v598, %v801
        %803 = vmatmul.f32.gmra.mxu0 %v692
        %v804 = vpop.f32.mrf.mxu0
        %v805 = vadd.f32 %v598, %v804
        %806 = vmatmul.f32.gmra.mxu0 %v695
        %v807 = vpop.f32.mrf.mxu0
        %v808 = vadd.f32 %v598, %v807
        %809 = vdwg.mxu0
        %v810 = vmul.f32 %v715, 0.01
        %v811 = vmul.f32 %v718, 0.01
        %v812 = vmul.f32 %v721, 0.01
        %v813 = vmul.f32 %v724, 0.01
        %v814 = vmul.f32 %v727, 0.01
        %v815 = vmul.f32 %v730, 0.01
        %v816 = vmul.f32 %v733, 0.01
        %v817 = vmul.f32 %v736, 0.01
        %v818 = vmul.f32 %v739, 0.01
        %v819 = vmul.f32 %v742, 0.01
        %v820 = vmul.f32 %v745, 0.01
        %v821 = vmul.f32 %v748, 0.01
        %v822 = vmul.f32 %v751, 0.01
        %v823 = vmul.f32 %v754, 0.01
        %v824 = vmul.f32 %v757, 0.01
        %v825 = vmul.f32 %v760, 0.01
        %v826 = vmul.f32 %v763, 0.01
        %v827 = vmul.f32 %v766, 0.01
        %v828 = vmul.f32 %v769, 0.01
        %v829 = vmul.f32 %v772, 0.01
        %v830 = vmul.f32 %v775, 0.01
        %v831 = vmul.f32 %v778, 0.01
        %v832 = vmul.f32 %v781, 0.01
        %v833 = vmul.f32 %v784, 0.01
        %v834 = vmul.f32 %v787, 0.01
        %v835 = vmul.f32 %v790, 0.01
        %v836 = vmul.f32 %v793, 0.01
        %v837 = vmul.f32 %v796, 0.01
        %v838 = vmul.f32 %v799, 0.01
        %v839 = vmul.f32 %v802, 0.01
        %v840 = vmul.f32 %v805, 0.01
        %v841 = vmul.f32 %v808, 0.01
        %v842 = vmax.f32 %v715, %v810
        %v843 = vmax.f32 %v718, %v811
        %v844 = vmax.f32 %v721, %v812
        %v845 = vmax.f32 %v724, %v813
        %v846 = vmax.f32 %v727, %v814
        %v847 = vmax.f32 %v730, %v815
        %v848 = vmax.f32 %v733, %v816
        %v849 = vmax.f32 %v736, %v817
        %v850 = vmax.f32 %v739, %v818
        %v851 = vmax.f32 %v742, %v819
        %v852 = vmax.f32 %v745, %v820
        %v853 = vmax.f32 %v748, %v821
        %v854 = vmax.f32 %v751, %v822
        %v855 = vmax.f32 %v754, %v823
        %v856 = vmax.f32 %v757, %v824
        %v857 = vmax.f32 %v760, %v825
        %v858 = vmax.f32 %v763, %v826
        %v859 = vmax.f32 %v766, %v827
        %v860 = vmax.f32 %v769, %v828
        %v861 = vmax.f32 %v772, %v829
        %v862 = vmax.f32 %v775, %v830
        %v863 = vmax.f32 %v778, %v831
        %v864 = vmax.f32 %v781, %v832
        %v865 = vmax.f32 %v784, %v833
        %v866 = vmax.f32 %v787, %v834
        %v867 = vmax.f32 %v790, %v835
        %v868 = vmax.f32 %v793, %v836
        %v869 = vmax.f32 %v796, %v837
        %v870 = vmax.f32 %v799, %v838
        %v871 = vmax.f32 %v802, %v839
        %v872 = vmax.f32 %v805, %v840
        %v873 = vmax.f32 %v808, %v841
        %v874 = vld [vmem:[%s5] sm:$0xff]
        %v875 = vld [vmem:[%s5 + $0x8] sm:$0xff]
        %v876 = vld [vmem:[%s5 + $0x10] sm:$0xff]
        %v877 = vld [vmem:[%s5 + $0x18] sm:$0xff]
        %v878 = vld [vmem:[%s6] sm:$0x1]
        %v880 = vperm.slane %v878, 0
        %v883 = vsel %vm600, %v842, 0
        %v886 = vsel %vm600, %v843, 0
        %v889 = vsel %vm600, %v844, 0
        %v892 = vsel %vm600, %v845, 0
        %v895 = vsel %vm600, %v846, 0
        %v898 = vsel %vm600, %v847, 0
        %v901 = vsel %vm600, %v848, 0
        %v904 = vsel %vm600, %v849, 0
        %v907 = vsel %vm600, %v850, 0
        %v910 = vsel %vm600, %v851, 0
        %v913 = vsel %vm600, %v852, 0
        %v916 = vsel %vm600, %v853, 0
        %v919 = vsel %vm600, %v854, 0
        %v922 = vsel %vm600, %v855, 0
        %v925 = vsel %vm600, %v856, 0
        %v928 = vsel %vm600, %v857, 0
        %v931 = vsel %vm600, %v858, 0
        %v934 = vsel %vm600, %v859, 0
        %v937 = vsel %vm600, %v860, 0
        %v940 = vsel %vm600, %v861, 0
        %v943 = vsel %vm600, %v862, 0
        %v946 = vsel %vm600, %v863, 0
        %v949 = vsel %vm600, %v864, 0
        %v952 = vsel %vm600, %v865, 0
        %v955 = vsel %vm600, %v866, 0
        %v958 = vsel %vm600, %v867, 0
        %v961 = vsel %vm600, %v868, 0
        %v964 = vsel %vm600, %v869, 0
        %v967 = vsel %vm600, %v870, 0
        %v970 = vsel %vm600, %v871, 0
        %v973 = vsel %vm600, %v872, 0
        %v976 = vsel %vm600, %v873, 0
        %978 = vmatpush.msra.mxu0 0.0
        %979 = vmatpush.msra.mxu0 0.0
        %980 = vmatpush.msra.mxu0 0.0
        %981 = vmatpush.msra.mxu0 0.0
        %982 = vmatpush.msra.mxu0 0.0
        %983 = vmatpush.msra.mxu0 0.0
        %984 = vmatpush.msra.mxu0 0.0
        %985 = vmatpush.msra.mxu0 0.0
        %986 = vmatpush.msra.mxu0 0.0
        %987 = vmatpush.msra.mxu0 0.0
        %988 = vmatpush.msra.mxu0 0.0
        %989 = vmatpush.msra.mxu0 0.0
        %990 = vmatpush.msra.mxu0 %v877
        %991 = vmatpush.msra.mxu0 %v876
        %992 = vmatpush.msra.mxu0 %v875
        %993 = vmatpush.msra.mxu0 %v874
        %994 = vmatmul.f32.gmra.mxu0 %v883
        %v995 = vpop.f32.mrf.mxu0
        %v996 = vadd.f32 %v880, %v995
        %997 = vmatmul.f32.gmra.mxu0 %v886
        %v998 = vpop.f32.mrf.mxu0
        %v999 = vadd.f32 %v880, %v998
        %1000 = vmatmul.f32.gmra.mxu0 %v889
        %v1001 = vpop.f32.mrf.mxu0
        %v1002 = vadd.f32 %v880, %v1001
        %1003 = vmatmul.f32.gmra.mxu0 %v892
        %v1004 = vpop.f32.mrf.mxu0
        %v1005 = vadd.f32 %v880, %v1004
        %1006 = vmatmul.f32.gmra.mxu0 %v895
        %v1007 = vpop.f32.mrf.mxu0
        %v1008 = vadd.f32 %v880, %v1007
        %1009 = vmatmul.f32.gmra.mxu0 %v898
        %v1010 = vpop.f32.mrf.mxu0
        %v1011 = vadd.f32 %v880, %v1010
        %1012 = vmatmul.f32.gmra.mxu0 %v901
        %v1013 = vpop.f32.mrf.mxu0
        %v1014 = vadd.f32 %v880, %v1013
        %1015 = vmatmul.f32.gmra.mxu0 %v904
        %v1016 = vpop.f32.mrf.mxu0
        %v1017 = vadd.f32 %v880, %v1016
        %1018 = vmatmul.f32.gmra.mxu0 %v907
        %v1019 = vpop.f32.mrf.mxu0
        %v1020 = vadd.f32 %v880, %v1019
        %1021 = vmatmul.f32.gmra.mxu0 %v910
        %v1022 = vpop.f32.mrf.mxu0
        %v1023 = vadd.f32 %v880, %v1022
        %1024 = vmatmul.f32.gmra.mxu0 %v913
        %v1025 = vpop.f32.mrf.mxu0
        %v1026 = vadd.f32 %v880, %v1025
        %1027 = vmatmul.f32.gmra.mxu0 %v916
        %v1028 = vpop.f32.mrf.mxu0
        %v1029 = vadd.f32 %v880, %v1028
        %1030 = vmatmul.f32.gmra.mxu0 %v919
        %v1031 = vpop.f32.mrf.mxu0
        %v1032 = vadd.f32 %v880, %v1031
        %1033 = vmatmul.f32.gmra.mxu0 %v922
        %v1034 = vpop.f32.mrf.mxu0
        %v1035 = vadd.f32 %v880, %v1034
        %1036 = vmatmul.f32.gmra.mxu0 %v925
        %v1037 = vpop.f32.mrf.mxu0
        %v1038 = vadd.f32 %v880, %v1037
        %1039 = vmatmul.f32.gmra.mxu0 %v928
        %v1040 = vpop.f32.mrf.mxu0
        %v1041 = vadd.f32 %v880, %v1040
        %1042 = vmatmul.f32.gmra.mxu0 %v931
        %v1043 = vpop.f32.mrf.mxu0
        %v1044 = vadd.f32 %v880, %v1043
        %1045 = vmatmul.f32.gmra.mxu0 %v934
        %v1046 = vpop.f32.mrf.mxu0
        %v1047 = vadd.f32 %v880, %v1046
        %1048 = vmatmul.f32.gmra.mxu0 %v937
        %v1049 = vpop.f32.mrf.mxu0
        %v1050 = vadd.f32 %v880, %v1049
        %1051 = vmatmul.f32.gmra.mxu0 %v940
        %v1052 = vpop.f32.mrf.mxu0
        %v1053 = vadd.f32 %v880, %v1052
        %1054 = vmatmul.f32.gmra.mxu0 %v943
        %v1055 = vpop.f32.mrf.mxu0
        %v1056 = vadd.f32 %v880, %v1055
        %1057 = vmatmul.f32.gmra.mxu0 %v946
        %v1058 = vpop.f32.mrf.mxu0
        %v1059 = vadd.f32 %v880, %v1058
        %1060 = vmatmul.f32.gmra.mxu0 %v949
        %v1061 = vpop.f32.mrf.mxu0
        %v1062 = vadd.f32 %v880, %v1061
        %1063 = vmatmul.f32.gmra.mxu0 %v952
        %v1064 = vpop.f32.mrf.mxu0
        %v1065 = vadd.f32 %v880, %v1064
        %1066 = vmatmul.f32.gmra.mxu0 %v955
        %v1067 = vpop.f32.mrf.mxu0
        %v1068 = vadd.f32 %v880, %v1067
        %1069 = vmatmul.f32.gmra.mxu0 %v958
        %v1070 = vpop.f32.mrf.mxu0
        %v1071 = vadd.f32 %v880, %v1070
        %1072 = vmatmul.f32.gmra.mxu0 %v961
        %v1073 = vpop.f32.mrf.mxu0
        %v1074 = vadd.f32 %v880, %v1073
        %1075 = vmatmul.f32.gmra.mxu0 %v964
        %v1076 = vpop.f32.mrf.mxu0
        %v1077 = vadd.f32 %v880, %v1076
        %1078 = vmatmul.f32.gmra.mxu0 %v967
        %v1079 = vpop.f32.mrf.mxu0
        %v1080 = vadd.f32 %v880, %v1079
        %1081 = vmatmul.f32.gmra.mxu0 %v970
        %v1082 = vpop.f32.mrf.mxu0
        %v1083 = vadd.f32 %v880, %v1082
        %1084 = vmatmul.f32.gmra.mxu0 %v973
        %v1085 = vpop.f32.mrf.mxu0
        %v1086 = vadd.f32 %v880, %v1085
        %1087 = vmatmul.f32.gmra.mxu0 %v976
        %v1088 = vpop.f32.mrf.mxu0
        %v1089 = vadd.f32 %v880, %v1088
        %1090 = vdwg.mxu0
        %1091 = vmax.xlane.f32.xlu0 %v996
        %v1092 = vpop.xlane.xlu0 %1091
        %1093 = vmax.xlane.f32.xlu0 %v999
        %v1094 = vpop.xlane.xlu0 %1093
        %1095 = vmax.xlane.f32.xlu0 %v1002
        %v1096 = vpop.xlane.xlu0 %1095
        %1097 = vmax.xlane.f32.xlu0 %v1005
        %v1098 = vpop.xlane.xlu0 %1097
        %1099 = vmax.xlane.f32.xlu0 %v1008
        %v1100 = vpop.xlane.xlu0 %1099
        %1101 = vmax.xlane.f32.xlu0 %v1011
        %v1102 = vpop.xlane.xlu0 %1101
        %1103 = vmax.xlane.f32.xlu0 %v1014
        %v1104 = vpop.xlane.xlu0 %1103
        %1105 = vmax.xlane.f32.xlu0 %v1017
        %v1106 = vpop.xlane.xlu0 %1105
        %1107 = vmax.xlane.f32.xlu0 %v1020
        %v1108 = vpop.xlane.xlu0 %1107
        %1109 = vmax.xlane.f32.xlu0 %v1023
        %v1110 = vpop.xlane.xlu0 %1109
        %1111 = vmax.xlane.f32.xlu0 %v1026
        %v1112 = vpop.xlane.xlu0 %1111
        %1113 = vmax.xlane.f32.xlu0 %v1029
        %v1114 = vpop.xlane.xlu0 %1113
        %1115 = vmax.xlane.f32.xlu0 %v1032
        %v1116 = vpop.xlane.xlu0 %1115
        %1117 = vmax.xlane.f32.xlu0 %v1035
        %v1118 = vpop.xlane.xlu0 %1117
        %1119 = vmax.xlane.f32.xlu0 %v1038
        %v1120 = vpop.xlane.xlu0 %1119
        %1121 = vmax.xlane.f32.xlu0 %v1041
        %v1122 = vpop.xlane.xlu0 %1121
        %1123 = vmax.xlane.f32.xlu0 %v1044
        %v1124 = vpop.xlane.xlu0 %1123
        %1125 = vmax.xlane.f32.xlu0 %v1047
        %v1126 = vpop.xlane.xlu0 %1125
        %1127 = vmax.xlane.f32.xlu0 %v1050
        %v1128 = vpop.xlane.xlu0 %1127
        %1129 = vmax.xlane.f32.xlu0 %v1053
        %v1130 = vpop.xlane.xlu0 %1129
        %1131 = vmax.xlane.f32.xlu0 %v1056
        %v1132 = vpop.xlane.xlu0 %1131
        %1133 = vmax.xlane.f32.xlu0 %v1059
        %v1134 = vpop.xlane.xlu0 %1133
        %1135 = vmax.xlane.f32.xlu0 %v1062
        %v1136 = vpop.xlane.xlu0 %1135
        %1137 = vmax.xlane.f32.xlu0 %v1065
        %v1138 = vpop.xlane.xlu0 %1137
        %1139 = vmax.xlane.f32.xlu0 %v1068
        %v1140 = vpop.xlane.xlu0 %1139
        %1141 = vmax.xlane.f32.xlu0 %v1071
        %v1142 = vpop.xlane.xlu0 %1141
        %1143 = vmax.xlane.f32.xlu0 %v1074
        %v1144 = vpop.xlane.xlu0 %1143
        %1145 = vmax.xlane.f32.xlu0 %v1077
        %v1146 = vpop.xlane.xlu0 %1145
        %1147 = vmax.xlane.f32.xlu0 %v1080
        %v1148 = vpop.xlane.xlu0 %1147
        %1149 = vmax.xlane.f32.xlu0 %v1083
        %v1150 = vpop.xlane.xlu0 %1149
        %1151 = vmax.xlane.f32.xlu0 %v1086
        %v1152 = vpop.xlane.xlu0 %1151
        %1153 = vmax.xlane.f32.xlu0 %v1089
        %v1154 = vpop.xlane.xlu0 %1153
        %v1155 = vsub.f32 %v996, %v1092
        %v1156 = vsub.f32 %v999, %v1094
        %v1157 = vsub.f32 %v1002, %v1096
        %v1158 = vsub.f32 %v1005, %v1098
        %v1159 = vsub.f32 %v1008, %v1100
        %v1160 = vsub.f32 %v1011, %v1102
        %v1161 = vsub.f32 %v1014, %v1104
        %v1162 = vsub.f32 %v1017, %v1106
        %v1163 = vsub.f32 %v1020, %v1108
        %v1164 = vsub.f32 %v1023, %v1110
        %v1165 = vsub.f32 %v1026, %v1112
        %v1166 = vsub.f32 %v1029, %v1114
        %v1167 = vsub.f32 %v1032, %v1116
        %v1168 = vsub.f32 %v1035, %v1118
        %v1169 = vsub.f32 %v1038, %v1120
        %v1170 = vsub.f32 %v1041, %v1122
        %v1171 = vsub.f32 %v1044, %v1124
        %v1172 = vsub.f32 %v1047, %v1126
        %v1173 = vsub.f32 %v1050, %v1128
        %v1174 = vsub.f32 %v1053, %v1130
        %v1175 = vsub.f32 %v1056, %v1132
        %v1176 = vsub.f32 %v1059, %v1134
        %v1177 = vsub.f32 %v1062, %v1136
        %v1178 = vsub.f32 %v1065, %v1138
        %v1179 = vsub.f32 %v1068, %v1140
        %v1180 = vsub.f32 %v1071, %v1142
        %v1181 = vsub.f32 %v1074, %v1144
        %v1182 = vsub.f32 %v1077, %v1146
        %v1183 = vsub.f32 %v1080, %v1148
        %v1184 = vsub.f32 %v1083, %v1150
        %v1185 = vsub.f32 %v1086, %v1152
        %v1186 = vsub.f32 %v1089, %v1154
        %v1187 = vmul.f32 %v1155, 1.442695
        %v1188 = vpow.pop %v1187
        %v1189 = vmul.f32 %v1156, 1.442695
        %v1190 = vpow.pop %v1189
        %v1191 = vmul.f32 %v1157, 1.442695
        %v1192 = vpow.pop %v1191
        %v1193 = vmul.f32 %v1158, 1.442695
        %v1194 = vpow.pop %v1193
        %v1195 = vmul.f32 %v1159, 1.442695
        %v1196 = vpow.pop %v1195
        %v1197 = vmul.f32 %v1160, 1.442695
        %v1198 = vpow.pop %v1197
        %v1199 = vmul.f32 %v1161, 1.442695
        %v1200 = vpow.pop %v1199
        %v1201 = vmul.f32 %v1162, 1.442695
        %v1202 = vpow.pop %v1201
        %v1203 = vmul.f32 %v1163, 1.442695
        %v1204 = vpow.pop %v1203
        %v1205 = vmul.f32 %v1164, 1.442695
        %v1206 = vpow.pop %v1205
        %v1207 = vmul.f32 %v1165, 1.442695
        %v1208 = vpow.pop %v1207
        %v1209 = vmul.f32 %v1166, 1.442695
        %v1210 = vpow.pop %v1209
        %v1211 = vmul.f32 %v1167, 1.442695
        %v1212 = vpow.pop %v1211
        %v1213 = vmul.f32 %v1168, 1.442695
        %v1214 = vpow.pop %v1213
        %v1215 = vmul.f32 %v1169, 1.442695
        %v1216 = vpow.pop %v1215
        %v1217 = vmul.f32 %v1170, 1.442695
        %v1218 = vpow.pop %v1217
        %v1219 = vmul.f32 %v1171, 1.442695
        %v1220 = vpow.pop %v1219
        %v1221 = vmul.f32 %v1172, 1.442695
        %v1222 = vpow.pop %v1221
        %v1223 = vmul.f32 %v1173, 1.442695
        %v1224 = vpow.pop %v1223
        %v1225 = vmul.f32 %v1174, 1.442695
        %v1226 = vpow.pop %v1225
        %v1227 = vmul.f32 %v1175, 1.442695
        %v1228 = vpow.pop %v1227
        %v1229 = vmul.f32 %v1176, 1.442695
        %v1230 = vpow.pop %v1229
        %v1231 = vmul.f32 %v1177, 1.442695
        %v1232 = vpow.pop %v1231
        %v1233 = vmul.f32 %v1178, 1.442695
        %v1234 = vpow.pop %v1233
        %v1235 = vmul.f32 %v1179, 1.442695
        %v1236 = vpow.pop %v1235
        %v1237 = vmul.f32 %v1180, 1.442695
        %v1238 = vpow.pop %v1237
        %v1239 = vmul.f32 %v1181, 1.442695
        %v1240 = vpow.pop %v1239
        %v1241 = vmul.f32 %v1182, 1.442695
        %v1242 = vpow.pop %v1241
        %v1243 = vmul.f32 %v1183, 1.442695
        %v1244 = vpow.pop %v1243
        %v1245 = vmul.f32 %v1184, 1.442695
        %v1246 = vpow.pop %v1245
        %v1247 = vmul.f32 %v1185, 1.442695
        %v1248 = vpow.pop %v1247
        %v1249 = vmul.f32 %v1186, 1.442695
        %v1250 = vpow.pop %v1249
        %1251 = vadd.xlane.f32.xlu0 %v1188
        %v1252 = vpop.xlane.xlu0 %1251
        %1253 = vadd.xlane.f32.xlu0 %v1190
        %v1254 = vpop.xlane.xlu0 %1253
        %1255 = vadd.xlane.f32.xlu0 %v1192
        %v1256 = vpop.xlane.xlu0 %1255
        %1257 = vadd.xlane.f32.xlu0 %v1194
        %v1258 = vpop.xlane.xlu0 %1257
        %1259 = vadd.xlane.f32.xlu0 %v1196
        %v1260 = vpop.xlane.xlu0 %1259
        %1261 = vadd.xlane.f32.xlu0 %v1198
        %v1262 = vpop.xlane.xlu0 %1261
        %1263 = vadd.xlane.f32.xlu0 %v1200
        %v1264 = vpop.xlane.xlu0 %1263
        %1265 = vadd.xlane.f32.xlu0 %v1202
        %v1266 = vpop.xlane.xlu0 %1265
        %1267 = vadd.xlane.f32.xlu0 %v1204
        %v1268 = vpop.xlane.xlu0 %1267
        %1269 = vadd.xlane.f32.xlu0 %v1206
        %v1270 = vpop.xlane.xlu0 %1269
        %1271 = vadd.xlane.f32.xlu0 %v1208
        %v1272 = vpop.xlane.xlu0 %1271
        %1273 = vadd.xlane.f32.xlu0 %v1210
        %v1274 = vpop.xlane.xlu0 %1273
        %1275 = vadd.xlane.f32.xlu0 %v1212
        %v1276 = vpop.xlane.xlu0 %1275
        %1277 = vadd.xlane.f32.xlu0 %v1214
        %v1278 = vpop.xlane.xlu0 %1277
        %1279 = vadd.xlane.f32.xlu0 %v1216
        %v1280 = vpop.xlane.xlu0 %1279
        %1281 = vadd.xlane.f32.xlu0 %v1218
        %v1282 = vpop.xlane.xlu0 %1281
        %1283 = vadd.xlane.f32.xlu0 %v1220
        %v1284 = vpop.xlane.xlu0 %1283
        %1285 = vadd.xlane.f32.xlu0 %v1222
        %v1286 = vpop.xlane.xlu0 %1285
        %1287 = vadd.xlane.f32.xlu0 %v1224
        %v1288 = vpop.xlane.xlu0 %1287
        %1289 = vadd.xlane.f32.xlu0 %v1226
        %v1290 = vpop.xlane.xlu0 %1289
        %1291 = vadd.xlane.f32.xlu0 %v1228
        %v1292 = vpop.xlane.xlu0 %1291
        %1293 = vadd.xlane.f32.xlu0 %v1230
        %v1294 = vpop.xlane.xlu0 %1293
        %1295 = vadd.xlane.f32.xlu0 %v1232
        %v1296 = vpop.xlane.xlu0 %1295
        %1297 = vadd.xlane.f32.xlu0 %v1234
        %v1298 = vpop.xlane.xlu0 %1297
        %1299 = vadd.xlane.f32.xlu0 %v1236
        %v1300 = vpop.xlane.xlu0 %1299
        %1301 = vadd.xlane.f32.xlu0 %v1238
        %v1302 = vpop.xlane.xlu0 %1301
        %1303 = vadd.xlane.f32.xlu0 %v1240
        %v1304 = vpop.xlane.xlu0 %1303
        %1305 = vadd.xlane.f32.xlu0 %v1242
        %v1306 = vpop.xlane.xlu0 %1305
        %1307 = vadd.xlane.f32.xlu0 %v1244
        %v1308 = vpop.xlane.xlu0 %1307
        %1309 = vadd.xlane.f32.xlu0 %v1246
        %v1310 = vpop.xlane.xlu0 %1309
        %1311 = vadd.xlane.f32.xlu0 %v1248
        %v1312 = vpop.xlane.xlu0 %1311
        %1313 = vadd.xlane.f32.xlu0 %v1250
        %v1314 = vpop.xlane.xlu0 %1313
        %v1315 = vrcp.pop %v1252
        %v1316 = vrcp.pop %v1254
        %v1317 = vrcp.pop %v1256
        %v1318 = vrcp.pop %v1258
        %v1319 = vrcp.pop %v1260
        %v1320 = vrcp.pop %v1262
        %v1321 = vrcp.pop %v1264
        %v1322 = vrcp.pop %v1266
        %v1323 = vrcp.pop %v1268
        %v1324 = vrcp.pop %v1270
        %v1325 = vrcp.pop %v1272
        %v1326 = vrcp.pop %v1274
        %v1327 = vrcp.pop %v1276
        %v1328 = vrcp.pop %v1278
        %v1329 = vrcp.pop %v1280
        %v1330 = vrcp.pop %v1282
        %v1331 = vrcp.pop %v1284
        %v1332 = vrcp.pop %v1286
        %v1333 = vrcp.pop %v1288
        %v1334 = vrcp.pop %v1290
        %v1335 = vrcp.pop %v1292
        %v1336 = vrcp.pop %v1294
        %v1337 = vrcp.pop %v1296
        %v1338 = vrcp.pop %v1298
        %v1339 = vrcp.pop %v1300
        %v1340 = vrcp.pop %v1302
        %v1341 = vrcp.pop %v1304
        %v1342 = vrcp.pop %v1306
        %v1343 = vrcp.pop %v1308
        %v1344 = vrcp.pop %v1310
        %v1345 = vrcp.pop %v1312
        %v1346 = vrcp.pop %v1314
        %v1347 = vmul.f32 %v1188, %v1315
        %v1348 = vmul.f32 %v1190, %v1316
        %v1349 = vmul.f32 %v1192, %v1317
        %v1350 = vmul.f32 %v1194, %v1318
        %v1351 = vmul.f32 %v1196, %v1319
        %v1352 = vmul.f32 %v1198, %v1320
        %v1353 = vmul.f32 %v1200, %v1321
        %v1354 = vmul.f32 %v1202, %v1322
        %v1355 = vmul.f32 %v1204, %v1323
        %v1356 = vmul.f32 %v1206, %v1324
        %v1357 = vmul.f32 %v1208, %v1325
        %v1358 = vmul.f32 %v1210, %v1326
        %v1359 = vmul.f32 %v1212, %v1327
        %v1360 = vmul.f32 %v1214, %v1328
        %v1361 = vmul.f32 %v1216, %v1329
        %v1362 = vmul.f32 %v1218, %v1330
        %v1363 = vmul.f32 %v1220, %v1331
        %v1364 = vmul.f32 %v1222, %v1332
        %v1365 = vmul.f32 %v1224, %v1333
        %v1366 = vmul.f32 %v1226, %v1334
        %v1367 = vmul.f32 %v1228, %v1335
        %v1368 = vmul.f32 %v1230, %v1336
        %v1369 = vmul.f32 %v1232, %v1337
        %v1370 = vmul.f32 %v1234, %v1338
        %v1371 = vmul.f32 %v1236, %v1339
        %v1372 = vmul.f32 %v1238, %v1340
        %v1373 = vmul.f32 %v1240, %v1341
        %v1374 = vmul.f32 %v1242, %v1342
        %v1375 = vmul.f32 %v1244, %v1343
        %v1376 = vmul.f32 %v1246, %v1344
        %v1377 = vmul.f32 %v1248, %v1345
        %v1378 = vmul.f32 %v1250, %v1346
        %v1379 = vmul.f32 %v1347, 0.5
        %v1380 = vmul.f32 %v1348, 0.5
        %v1381 = vmul.f32 %v1349, 0.5
        %v1382 = vmul.f32 %v1350, 0.5
        %v1383 = vmul.f32 %v1351, 0.5
        %v1384 = vmul.f32 %v1352, 0.5
        %v1385 = vmul.f32 %v1353, 0.5
        %v1386 = vmul.f32 %v1354, 0.5
        %v1387 = vmul.f32 %v1355, 0.5
        %v1388 = vmul.f32 %v1356, 0.5
        %v1389 = vmul.f32 %v1357, 0.5
        %v1390 = vmul.f32 %v1358, 0.5
        %v1391 = vmul.f32 %v1359, 0.5
        %v1392 = vmul.f32 %v1360, 0.5
        %v1393 = vmul.f32 %v1361, 0.5
        %v1394 = vmul.f32 %v1362, 0.5
        %v1395 = vmul.f32 %v1363, 0.5
        %v1396 = vmul.f32 %v1364, 0.5
        %v1397 = vmul.f32 %v1365, 0.5
        %v1398 = vmul.f32 %v1366, 0.5
        %v1399 = vmul.f32 %v1367, 0.5
        %v1400 = vmul.f32 %v1368, 0.5
        %v1401 = vmul.f32 %v1369, 0.5
        %v1402 = vmul.f32 %v1370, 0.5
        %v1403 = vmul.f32 %v1371, 0.5
        %v1404 = vmul.f32 %v1372, 0.5
        %v1405 = vmul.f32 %v1373, 0.5
        %v1406 = vmul.f32 %v1374, 0.5
        %v1407 = vmul.f32 %v1375, 0.5
        %v1408 = vmul.f32 %v1376, 0.5
        %v1409 = vmul.f32 %v1377, 0.5
        %v1410 = vmul.f32 %v1378, 0.5
        %v1411 = vadd.f32 %v1379, 0.0625
        %v1412 = vadd.f32 %v1380, 0.0625
        %v1413 = vadd.f32 %v1381, 0.0625
        %v1414 = vadd.f32 %v1382, 0.0625
        %v1415 = vadd.f32 %v1383, 0.0625
        %v1416 = vadd.f32 %v1384, 0.0625
        %v1417 = vadd.f32 %v1385, 0.0625
        %v1418 = vadd.f32 %v1386, 0.0625
        %v1419 = vadd.f32 %v1387, 0.0625
        %v1420 = vadd.f32 %v1388, 0.0625
        %v1421 = vadd.f32 %v1389, 0.0625
        %v1422 = vadd.f32 %v1390, 0.0625
        %v1423 = vadd.f32 %v1391, 0.0625
        %v1424 = vadd.f32 %v1392, 0.0625
        %v1425 = vadd.f32 %v1393, 0.0625
        %v1426 = vadd.f32 %v1394, 0.0625
        %v1427 = vadd.f32 %v1395, 0.0625
        %v1428 = vadd.f32 %v1396, 0.0625
        %v1429 = vadd.f32 %v1397, 0.0625
        %v1430 = vadd.f32 %v1398, 0.0625
        %v1431 = vadd.f32 %v1399, 0.0625
        %v1432 = vadd.f32 %v1400, 0.0625
        %v1433 = vadd.f32 %v1401, 0.0625
        %v1434 = vadd.f32 %v1402, 0.0625
        %v1435 = vadd.f32 %v1403, 0.0625
        %v1436 = vadd.f32 %v1404, 0.0625
        %v1437 = vadd.f32 %v1405, 0.0625
        %v1438 = vadd.f32 %v1406, 0.0625
        %v1439 = vadd.f32 %v1407, 0.0625
        %v1440 = vadd.f32 %v1408, 0.0625
        %v1441 = vadd.f32 %v1409, 0.0625
        %v1442 = vadd.f32 %v1410, 0.0625
        %1443 = vst [vmem:[%s272] sm:$0xff] %v1411
        %1444 = vst [vmem:[%s272 + $0x8] sm:$0xff] %v1412
        %1445 = vst [vmem:[%s272 + $0x10] sm:$0xff] %v1413
        %1446 = vst [vmem:[%s272 + $0x18] sm:$0xff] %v1414
        %1447 = vst [vmem:[%s272 + $0x20] sm:$0xff] %v1415
        %1448 = vst [vmem:[%s272 + $0x28] sm:$0xff] %v1416
        %1449 = vst [vmem:[%s272 + $0x30] sm:$0xff] %v1417
        %1450 = vst [vmem:[%s272 + $0x38] sm:$0xff] %v1418
        %1451 = vst [vmem:[%s272 + $0x40] sm:$0xff] %v1419
        %1452 = vst [vmem:[%s272 + $0x48] sm:$0xff] %v1420
        %1453 = vst [vmem:[%s272 + $0x50] sm:$0xff] %v1421
        %1454 = vst [vmem:[%s272 + $0x58] sm:$0xff] %v1422
        %1455 = vst [vmem:[%s272 + $0x60] sm:$0xff] %v1423
        %1456 = vst [vmem:[%s272 + $0x68] sm:$0xff] %v1424
        %1457 = vst [vmem:[%s272 + $0x70] sm:$0xff] %v1425
        %1458 = vst [vmem:[%s272 + $0x78] sm:$0xff] %v1426
        %1459 = vst [vmem:[%s272 + $0x80] sm:$0xff] %v1427
        %1460 = vst [vmem:[%s272 + $0x88] sm:$0xff] %v1428
        %1461 = vst [vmem:[%s272 + $0x90] sm:$0xff] %v1429
        %1462 = vst [vmem:[%s272 + $0x98] sm:$0xff] %v1430
        %1463 = vst [vmem:[%s272 + $0xa0] sm:$0xff] %v1431
        %1464 = vst [vmem:[%s272 + $0xa8] sm:$0xff] %v1432
        %1465 = vst [vmem:[%s272 + $0xb0] sm:$0xff] %v1433
        %1466 = vst [vmem:[%s272 + $0xb8] sm:$0xff] %v1434
        %1467 = vst [vmem:[%s272 + $0xc0] sm:$0xff] %v1435
        %1468 = vst [vmem:[%s272 + $0xc8] sm:$0xff] %v1436
        %1469 = vst [vmem:[%s272 + $0xd0] sm:$0xff] %v1437
        %1470 = vst [vmem:[%s272 + $0xd8] sm:$0xff] %v1438
        %1471 = vst [vmem:[%s272 + $0xe0] sm:$0xff] %v1439
        %1472 = vst [vmem:[%s272 + $0xe8] sm:$0xff] %v1440
        %1473 = vst [vmem:[%s272 + $0xf0] sm:$0xff] %v1441
        %1474 = vst [vmem:[%s272 + $0xf8] sm:$0xff] %v1442
        %s1475 = sand.u32 %s181, 1
        %s1476 = scalar_lea.sflag [#allocation3], %s1475
        %s1477 = sand.u32 %s181, 1
        %s1478 = smul.addr %s1477, 256
        %s1479 = scalar_lea.vmem [#allocation2], %s1478
        // Predicated region
        $region49: #{tpu_custom_call.1} parent=47 // pred_check
          %p1480 = pneg %p191
        $region50: #{tpu_custom_call.1} parent=47 // pred_check_branch
          %1482 = sbr.rel (%p1480) target = $region52
        $region51: #{tpu_custom_call.1} parent=47 // pred_region
          %s1483 = smul.u32 32, %s21
          %1485 = vsyncadd %s1476, 0
          %s1486 = smul.addr %s1483, 8
          %s1487 = scalar_lea.hbm %s7, %s1486
          %s1488 = sshll.u32 %s1479, 4
          %s1489 = int_to_ptr.vmem [resolvable:$true] %s1488
          %s1490 = sshll.u32 %s1487, 4
          %s1491 = int_to_ptr.hbm [resolvable:$true] %s1490
          %1496 = dma.vmem_to_hbm [thread:$0]  %s1489, 4096, %s1491, %s1476, 128, 128, 8
        $region52: #{tpu_custom_call.1} parent=47 // pred_fallthru
          _
      $region48: #{tpu_custom_call.1} parent=5 // pred_fallthru
        _
      %p1497 = scmp.le.s32.totalorder 2, %s16
      // Predicated region
      $region53: #{tpu_custom_call.1} parent=5 // pred_check
        %p1498 = pneg %p1497
      $region54: #{tpu_custom_call.1} parent=5 // pred_check_branch
        %1500 = sbr.rel (%p1498) target = $region56
      $region55: #{tpu_custom_call.1} parent=5 // pred_region
        %s1501 = ssub.s32 %s16, 2
        // Predicated region
        $region57: #{tpu_custom_call.1} parent=55 // pred_check
          %p1502 = pneg %p197
        $region58: #{tpu_custom_call.1} parent=55 // pred_check_branch
          %1504 = sbr.rel (%p1502) target = $region60
        $region59: #{tpu_custom_call.1} parent=55 // pred_region
          %s1505 = sand.u32 %s182, 1
          %s1506 = scalar_lea.sflag [#allocation3], %s1505
          %s1507 = sand.u32 %s182, 1
          %s1508 = smul.addr %s1507, 256
          %s1509 = scalar_lea.vmem [#allocation2], %s1508
          %1511 = dma.done %s1506, 4096
        $region60: #{tpu_custom_call.1} parent=55 // pred_fallthru
          _
      $region56: #{tpu_custom_call.1} parent=5 // pred_fallthru
        _
    $region6: #{tpu_custom_call.1} parent=1 // loop_footer
      %s20 = sadd.s32 1, %s16
    $region7: #{tpu_custom_call.1} parent=1 // loop_footer_branch
      %15 = sbr.rel target = $region3
    $region8: #{tpu_custom_call.1} parent=1 // loop_exit
      _
    %1512 = vsyncpa [#allocation3], 1
    %s1513 = scalar_lea.sflag [#allocation3], 1
    %1514 = vsyncpa %s1513, 1

</llo_original>
